<compile_context>
chip_gen: v6e
topology: v6e:2x2x1
jax: 0.10.0
libtpu: 0.0.40
codegen_flags: <defaults>
</compile_context>

<pallas_src>
import functools

import jax
import jax.numpy as jnp
from jax.experimental import pallas as pl
from jax.experimental.pallas import tpu as pltpu


# ----------------------------- matching kernel ------------------------------

def _match_kernel(othresh, cthresh, prev_ref, tloc_ref, tcls_ref, out_ref):
    prev = prev_ref[...]                       # (5, P): conf, xmin, ymin, xmax, ymax
    conf = prev[0:1, :]
    tl = tloc_ref[0]                           # (O, 4) GT boxes
    tc = tcls_ref[0]                           # (O, 1) GT labels (float-valued)
    num_objs = tl.shape[0]

    t_xmin, t_ymin = tl[:, 0:1], tl[:, 1:2]
    t_xmax, t_ymax = tl[:, 2:3], tl[:, 3:4]            # (O, 1)
    p_xmin, p_ymin = prev[1:2, :], prev[2:3, :]
    p_xmax, p_ymax = prev[3:4, :], prev[4:5, :]        # (1, P)

    # jaccard (IoU) between every GT box and every prior -> (O, P)
    iw = jnp.maximum(jnp.minimum(t_xmax, p_xmax) - jnp.maximum(t_xmin, p_xmin), 0.0)
    ih = jnp.maximum(jnp.minimum(t_ymax, p_ymax) - jnp.maximum(t_ymin, p_ymin), 0.0)
    inter = iw * ih
    area_t = (t_xmax - t_xmin) * (t_ymax - t_ymin)     # (O, 1)
    area_p = (p_xmax - p_xmin) * (p_ymax - p_ymin)     # (1, P)
    union = jnp.maximum(area_t + area_p - inter, 1e-12)  # eps: degenerate/padded boxes
    overlap = inter / union                            # (O, P)

    # best GT per prior (max over O), first index on ties
    best = jnp.max(overlap, axis=0, keepdims=True)     # (1, P)
    iota_o = jax.lax.broadcasted_iota(jnp.int32, overlap.shape, 0)
    cand = jnp.where(overlap == best, iota_o, num_objs)
    best_idx = jnp.min(cand, axis=0, keepdims=True)    # (1, P)
    onehot = (iota_o == best_idx).astype(jnp.float32)  # (O, P)

    keep = jnp.logical_and(best >= othresh, conf >= cthresh).astype(jnp.float32)

    # exact VPU one-hot gathers (bit-exact; avoids MXU bf16 coordinate truncation)
    out_ref[0:1, :] = jnp.sum(onehot * tc, axis=0, keepdims=True)      # matched class
    out_ref[1:2, :] = keep                                             # mask
    out_ref[2:6, :] = prev[1:5, :]                                     # prior loc
    for c in range(4):
        out_ref[6 + c:7 + c, :] = jnp.sum(onehot * tl[:, c:c + 1],
                                          axis=0, keepdims=True)       # matched GT loc


def match_pallas(prev_cm, truths_loc, truths_cls, othresh, cthresh):
    """prev_cm [5, B*P_pad] (row 0 conf, rows 1-4 loc; lane = b*P_pad + p),
    truths_loc [B, O, 4], truths_cls [B, O].
    Returns the static slab [10, B*P_pad] in the loss kernel's layout."""
    _, ntot = prev_cm.shape
    B, O, _ = truths_loc.shape
    P = ntot // B
    kern = functools.partial(_match_kernel, float(othresh), float(cthresh))
    return pl.pallas_call(
        kern,
        out_shape=jax.ShapeDtypeStruct((10, ntot), jnp.float32),
        grid=(B,),
        in_specs=[pl.BlockSpec((5, P), lambda b: (0, b)),
                  pl.BlockSpec((1, O, 4), lambda b: (b, 0, 0)),
                  pl.BlockSpec((1, O, 1), lambda b: (b, 0, 0))],
        out_specs=pl.BlockSpec((10, P), lambda b: (0, b)),
        compiler_params=pltpu.CompilerParams(dimension_semantics=("parallel",)),
    )(prev_cm.astype(jnp.float32),
      truths_loc.astype(jnp.float32),
      truths_cls.reshape(B, O, 1).astype(jnp.float32))


# ------------------------------- loss kernel --------------------------------

def _loss_kernel(cls_ref, dis_ref, loc_ref, st_ref, out_ref, acc_ref, cnt_ref):
    j = pl.program_id(1)

    @pl.when(j == 0)
    def _init():
        acc_ref[...] = jnp.zeros_like(acc_ref)
        cnt_ref[...] = jnp.zeros_like(cnt_ref)

    st = st_ref[...]                              # (10, TN)
    lbl = st[0:1, :].astype(jnp.int32)            # (1, TN) matched class
    m = st[1:2, :]                                # (1, TN) keep mask
    dloc = st[2:6, :] - st[6:10, :]               # prev_loc - loc_match, (4, TN)
    m3 = m[None]                                  # (1, 1, TN)

    # --- cross entropy per lane: logsumexp(logits) - logits[label] ---
    logits = cls_ref[...]                                    # (L, C, TN)
    mx = jnp.max(logits, axis=1, keepdims=True)              # (L, 1, TN)
    lse = mx + jnp.log(jnp.sum(jnp.exp(logits - mx), axis=1, keepdims=True))
    iota_c = jax.lax.broadcasted_iota(jnp.int32, logits.shape, 1)
    picked = jnp.sum(jnp.where(iota_c == lbl[None], logits, 0.0),
                     axis=1, keepdims=True)
    ce = lse - picked                                        # (L, 1, TN)

    # --- smooth L1 on (d_loc_t + prev_loc - loc_match), summed over 4 coords ---
    x = loc_ref[...] + dloc[None]                            # (L, 4, TN)
    ax = jnp.abs(x)
    sl1 = jnp.sum(jnp.where(ax < 1.0, 0.5 * x * x, ax - 0.5),
                  axis=1, keepdims=True)                     # (L, 1, TN)

    # --- packed BCE: rows of dis_ref are [p_t, p_s, 1-p_s] -> ONE log call ---
    # clamp BEFORE the mask multiply (log(0) = -inf on padded lanes)
    bce = -jnp.maximum(jnp.log(dis_ref[...]), -100.0)        # (L, 3, TN)

    # accumulate masked partial sums into dense slabs
    acc_ref[:, 0:1, :] += ce * m3
    acc_ref[:, 1:2, :] += sl1 * m3
    acc_ref[:, 2:5, :] += bce * m3
    cnt_ref[...] += m                                        # mask count, once

    @pl.when(j == pl.num_programs(1) - 1)
    def _final():
        sums = jnp.sum(acc_ref[...], axis=-1)                        # (L, 5)
        cnt = jnp.sum(cnt_ref[...], axis=-1, keepdims=True)          # (1, 1)
        out_ref[:, 0:5] = sums
        out_ref[:, 5:6] = jnp.broadcast_to(cnt, (sums.shape[0], 1))


def loss_sums_pallas(cls_s_all, dis_all, loc_t_all, static, *,
                     max_lane_tile=8192, ncores=2,
                     vmem_budget=20 * 1024 * 1024):
    """cls_s_all [L,C,N], dis_all [L,3,N] (rows p_t, p_s, 1-p_s),
    loc_t_all [L,4,N], static [10,N].  Returns (ncores, L, 6) partial sums:
    columns [ce, smooth_l1, -log p_t, -log p_s, -log(1-p_s), mask_count]."""
    L, C, N = cls_s_all.shape

    lane_in_bytes = 4 * (L * C + 3 * L + 4 * L + 10)    # f32 bytes per lane (inputs)
    lane_scr_bytes = 4 * (8 * L + 8)                    # scratch (sublane-padded)
    cap = max(128, (vmem_budget // (2 * lane_in_bytes + lane_scr_bytes)) // 128 * 128)
    TN = int(min(int(max_lane_tile), pl.cdiv(N, 128) * 128, cap))
    NT = pl.cdiv(N, TN)
    nt_per_core = pl.cdiv(NT, ncores)
    n_pad = nt_per_core * ncores * TN
    pad = n_pad - N

    def _prep(a):
        a = a.astype(jnp.float32)
        if pad:
            a = jnp.pad(a, [(0, 0)] * (a.ndim - 1) + [(0, pad)])
        return a

    vmem_limit = int(min(max(2 * TN * (2 * lane_in_bytes + lane_scr_bytes),
                             8 * 1024 * 1024),
                         48 * 1024 * 1024))

    idx3 = lambda c, j: (0, 0, c * nt_per_core + j)
    idx2 = lambda c, j: (0, c * nt_per_core + j)

    return pl.pallas_call(
        _loss_kernel,
        out_shape=jax.ShapeDtypeStruct((ncores, L, 6), jnp.float32),
        grid=(ncores, nt_per_core),
        in_specs=[pl.BlockSpec((L, C, TN), idx3),
                  pl.BlockSpec((L, 3, TN), idx3),
                  pl.BlockSpec((L, 4, TN), idx3),
                  pl.BlockSpec((10, TN), idx2)],
        out_specs=pl.BlockSpec((None, L, 6), lambda c, j: (c, 0, 0)),
        scratch_shapes=[pltpu.VMEM((L, 5, TN), jnp.float32),
                        pltpu.VMEM((1, TN), jnp.float32)],
        compiler_params=pltpu.CompilerParams(
            dimension_semantics=("parallel", "arbitrary"),
            vmem_limit_bytes=vmem_limit),
    )(_prep(cls_s_all), _prep(dis_all), _prep(loc_t_all), _prep(static))


# ------------------------------ module wrapper -------------------------------

class DiscriminatorLoss:
    def __init__(self, batchsize, num_class, conf_thresh, overlap_thresh, top_k):
        self.batchsize = batchsize
        self.num_class = num_class
        self.cthreshold = conf_thresh
        self.othreshold = overlap_thresh
        self.top_k = top_k
        self.num_prevs = num_class * top_k

    def __call__(self, d_T, d_S, prev_t, target_loc, target_cls):
        # prev_t: [B, num_class, top_k, 5] (conf + 4 loc), like PyTorch.
        # target_loc/target_cls: fixed number of GT boxes per image.
        # TODO(synk): variable-length per-image target lists are padded to a
        # fixed O; the original's host-side print of the match count and the
        # Python `return (0, 0, 0)` early exit become a jnp.where on the count.
        f32 = jnp.float32
        B = prev_t.shape[0]
        P = self.num_prevs
        P_pad = ((P + 127) // 128) * 128
        N = B * P
        Np = B * P_pad
        L = len(d_T)

        # priors: one tiny (B*P_pad, 5) -> (5, B*P_pad) transpose, lane = b*P_pad + p
        prev = jnp.asarray(prev_t, f32).reshape(B, P, 5)
        if P_pad != P:
            padblk = jnp.zeros((B, P_pad - P, 5), f32).at[:, :, 0].set(-1e30)
            prev = jnp.concatenate([prev, padblk], axis=1)     # conf<<cthresh => mask 0
        prev_cm = prev.reshape(B * P_pad, 5).T                 # (5, Np)

        # matching: emits the loss kernel's static slab directly (no re-layout)
        static = match_pallas(prev_cm, target_loc, target_cls,
                              self.othreshold, self.cthreshold)   # (10, Np)

        def _to_lanes(a):
            # (N, K) -> (K, Np): single transpose, per-image lane pad if needed
            if P_pad != P:
                a = a.reshape(B, P, a.shape[1])
                a = jnp.pad(a, ((0, 0), (0, P_pad - P), (0, 0)))
                a = a.reshape(B * P_pad, a.shape[2])
            return a.T

        # merge all depths before the (single) transpose per stacked input
        cls_cat = jnp.concatenate([jnp.asarray(s[1], f32) for s in d_S], axis=1)  # (N, L*C)
        loc_cat = jnp.concatenate([jnp.asarray(t[2], f32) for t in d_T], axis=1)  # (N, L*4)
        dis_cols = []
        for t, s in zip(d_T, d_S):
            pt = jnp.asarray(t[0], f32).reshape(N, 1)
            ps = jnp.asarray(s[0], f32).reshape(N, 1)
            dis_cols += [pt, ps, 1.0 - ps]                     # packed BCE probs
        dis_cat = jnp.concatenate(dis_cols, axis=1)            # (N, L*3)

        C = cls_cat.shape[1] // L
        cls_s_all = _to_lanes(cls_cat).reshape(L, C, Np)
        loc_t_all = _to_lanes(loc_cat).reshape(L, 4, Np)
        dis_all = _to_lanes(dis_cat).reshape(L, 3, Np)

        partials = loss_sums_pallas(cls_s_all, dis_all, loc_t_all, static)  # (2, L, 6)
        sums = jnp.sum(partials, axis=0)                        # (L, 6)

        count = sums[0, 5]
        denom = jnp.maximum(count, 1.0)
        cls_loss = sums[:, 0] / denom                 # mean over matched rows
        loc_loss = sums[:, 1] / (denom * 4.0)         # mean over matched elements
        real_loss = sums[:, 2] / denom                # BCE(d_dis_t, 1)
        s_dis_loss = sums[:, 3] / denom               # BCE(d_dis_s, 1)
        fake_loss = sums[:, 4] / denom                # BCE(d_dis_s, 0)
        dis_loss = 0.5 * real_loss + 0.5 * fake_loss
        d_loss = cls_loss + loc_loss + dis_loss

        Lf = float(L)
        has = count > 0
        zero = jnp.float32(0.0)
        return (jnp.where(has, jnp.sum(d_loss) / Lf, zero),
                jnp.where(has, jnp.sum(dis_loss) / Lf, zero),
                jnp.where(has, jnp.sum(s_dis_loss) / Lf, zero))


# ---------------------------- pure-JAX reference ------------------------------

def reference_loss(d_T, d_S, prev_t, target_loc, target_cls, num_class, top_k,
                   conf_thresh, overlap_thresh):
    B = prev_t.shape[0]
    P = num_class * top_k
    prev = prev_t.reshape(B, P, 5).astype(jnp.float32)
    conf = prev[:, :, 0]
    ploc = prev[:, :, 1:]
    t = target_loc.astype(jnp.float32)                 # (B, O, 4)
    tc = target_cls.astype(jnp.float32)                # (B, O)

    ixmin = jnp.maximum(t[:, :, None, 0], ploc[:, None, :, 0])
    iymin = jnp.maximum(t[:, :, None, 1], ploc[:, None, :, 1])
    ixmax = jnp.minimum(t[:, :, None, 2], ploc[:, None, :, 2])
    iymax = jnp.minimum(t[:, :, None, 3], ploc[:, None, :, 3])
    inter = jnp.maximum(ixmax - ixmin, 0.0) * jnp.maximum(iymax - iymin, 0.0)
    at = (t[:, :, 2] - t[:, :, 0]) * (t[:, :, 3] - t[:, :, 1])
    ap = (ploc[:, :, 2] - ploc[:, :, 0]) * (ploc[:, :, 3] - ploc[:, :, 1])
    ov = inter / jnp.maximum(at[:, :, None] + ap[:, None, :] - inter, 1e-12)

    best = jnp.max(ov, axis=1)                          # (B, P)
    idx = jnp.argmax(ov, axis=1)                        # (B, P)
    cls_m = jax.vmap(lambda cb, ib: cb[ib])(tc, idx)    # (B, P)
    loc_m = jax.vmap(lambda tb, ib: tb[ib])(t, idx)     # (B, P, 4)
    maskf = ((best >= overlap_thresh) & (conf >= conf_thresh)).reshape(-1)

    n = jnp.sum(maskf.astype(jnp.float32))
    denom = jnp.maximum(n, 1.0)
    labels = cls_m.reshape(-1).astype(jnp.int32)
    plocf = ploc.reshape(-1, 4)
    locmf = loc_m.reshape(-1, 4)

    dl = dis = sd = jnp.float32(0.0)
    for (dt, _, lt), (ds_, cs, _) in zip(d_T, d_S):
        logits = cs.astype(jnp.float32)
        lse = jax.nn.logsumexp(logits, axis=1)
        picked = jnp.take_along_axis(logits, labels[:, None], axis=1)[:, 0]
        ce = jnp.sum(jnp.where(maskf, lse - picked, 0.0)) / denom
        x = lt.astype(jnp.float32) + plocf - locmf
        ax = jnp.abs(x)
        sl1 = jnp.where(ax < 1.0, 0.5 * x * x, ax - 0.5)
        loc_loss = jnp.sum(jnp.where(maskf[:, None], sl1, 0.0)) / (denom * 4.0)
        rl = jnp.sum(jnp.where(maskf[:, None], -jnp.maximum(jnp.log(dt), -100.0), 0.0)) / denom
        fl = jnp.sum(jnp.where(maskf[:, None], -jnp.maximum(jnp.log(1.0 - ds_), -100.0), 0.0)) / denom
        sl = jnp.sum(jnp.where(maskf[:, None], -jnp.maximum(jnp.log(ds_), -100.0), 0.0)) / denom
        d = 0.5 * rl + 0.5 * fl
        dis = dis + d
        sd = sd + sl
        dl = dl + ce + loc_loss + d

    Lf = float(len(d_T))
    has = n > 0
    z = jnp.float32(0.0)
    return (jnp.where(has, dl / Lf, z),
            jnp.where(has, dis / Lf, z),
            jnp.where(has, sd / Lf, z))


# ---------------------------------- demo -------------------------------------

if __name__ == "__main__":
    B, C, K, O = 2, 4, 32, 8          # batch, num_class, top_k, gt boxes/image
    P = C * K                          # num_prevs = 128
    N = B * P                          # 256 flattened priors
    key = jax.random.PRNGKey(0)
    ks = jax.random.split(key, 8)

    def rand_boxes(k, prefix):
        k1, k2, k3, k4 = jax.random.split(k, 4)
        xmin = jax.random.uniform(k1, prefix, minval=0.0, maxval=0.6)
        ymin = jax.random.uniform(k2, prefix, minval=0.0, maxval=0.6)
        w = jax.random.uniform(k3, prefix, minval=0.1, maxval=0.4)
        h = jax.random.uniform(k4, prefix, minval=0.1, maxval=0.4)
        return jnp.stack([xmin, ymin, xmin + w, ymin + h], axis=-1).astype(jnp.float32)

    prev_loc = rand_boxes(ks[0], (B, P))
    prev_conf = jax.nn.sigmoid(jax.random.normal(ks[1], (B, P), jnp.float32))
    prev_t = jnp.concatenate([prev_conf[..., None], prev_loc], axis=-1).reshape(B, C, K, 5)

    target_loc = rand_boxes(ks[2], (B, O))
    target_cls = jax.random.randint(ks[3], (B, O), 0, C).astype(jnp.float32)

    # two discriminator depths; each gives (d_dis [N,1] probs, d_cls [N,C] logits, d_loc [N,4])
    d_T, d_S = [], []
    for d in range(2):
        kd = jax.random.fold_in(ks[4], d)
        k1, k2, k3, k4, k5, k6 = jax.random.split(kd, 6)
        d_T.append((jax.nn.sigmoid(jax.random.normal(k1, (N, 1), jnp.float32)),
                    jax.random.normal(k2, (N, C), jnp.float32),
                    0.1 * jax.random.normal(k3, (N, 4), jnp.float32)))
        d_S.append((jax.nn.sigmoid(jax.random.normal(k4, (N, 1), jnp.float32)),
                    jax.random.normal(k5, (N, C), jnp.float32),
                    0.1 * jax.random.normal(k6, (N, 4), jnp.float32)))

    crit = DiscriminatorLoss(batchsize=B, num_class=C, conf_thresh=0.3,
                             overlap_thresh=0.05, top_k=K)
    out = crit(d_T, d_S, prev_t, target_loc, target_cls)
    out = jax.block_until_ready(out)

    ref = reference_loss(d_T, d_S, prev_t, target_loc, target_cls,
                         num_class=C, top_k=K, conf_thresh=0.3, overlap_thresh=0.05)
    ref = jax.block_until_ready(ref)
    for a, b in zip(out, ref):
        if not bool(jnp.allclose(a, b, rtol=1e-3, atol=1e-4)):
            raise SystemExit("mismatch: kernel=%r reference=%r" % (a, b))

    print("KERNEL_OK")
</pallas_src>

<mosaic_0001>
module attributes {stable_mosaic.version = 11 : i64} {
  func.func @_match_kernel(%arg0: i32, %arg1: memref<5x128xf32, #tpu.memory_space<vmem>>, %arg2: memref<1x8x4xf32, #tpu.memory_space<vmem>>, %arg3: memref<1x8x1xf32, #tpu.memory_space<vmem>>, %arg4: memref<10x128xf32, #tpu.memory_space<vmem>>) attributes {dimension_semantics = [#tpu.dimension_semantics<parallel>], iteration_bounds = array<i64: 2>, scalar_prefetch = 0 : i64, scratch_operands = 0 : i64, tpu.core_type = #tpu.core_type<tc>, window_params = [{transform_indices = @transform_0, window_bounds = array<i64: 5, 128>}, {transform_indices = @transform_1, window_bounds = array<i64: 1, 8, 4>}, {transform_indices = @transform_2, window_bounds = array<i64: 1, 8, 1>}, {transform_indices = @transform_3, window_bounds = array<i64: 10, 128>}]} {
    %c0 = arith.constant 0 : index
    %c0_0 = arith.constant 0 : index
    %0 = vector.load %arg1[%c0, %c0_0] : memref<5x128xf32, #tpu.memory_space<vmem>>, vector<5x128xf32>
    %1 = vector.extract_strided_slice %0 {offsets = [0, 0], sizes = [1, 128], strides = [1, 1]} : vector<5x128xf32> to vector<1x128xf32>
    %c0_1 = arith.constant 0 : index
    %c0_2 = arith.constant 0 : index
    %c0_3 = arith.constant 0 : index
    %2 = vector.load %arg2[%c0_1, %c0_2, %c0_3] : memref<1x8x4xf32, #tpu.memory_space<vmem>>, vector<1x8x4xf32>
    %3 = vector.shape_cast %2 : vector<1x8x4xf32> to vector<8x4xf32>
    %c0_4 = arith.constant 0 : index
    %c0_5 = arith.constant 0 : index
    %c0_6 = arith.constant 0 : index
    %4 = vector.load %arg3[%c0_4, %c0_5, %c0_6] : memref<1x8x1xf32, #tpu.memory_space<vmem>>, vector<1x8x1xf32>
    %5 = vector.shape_cast %4 : vector<1x8x1xf32> to vector<8x1xf32>
    %6 = vector.extract_strided_slice %3 {offsets = [0, 0], sizes = [8, 1], strides = [1, 1]} : vector<8x4xf32> to vector<8x1xf32>
    %7 = vector.extract_strided_slice %3 {offsets = [0, 1], sizes = [8, 1], strides = [1, 1]} : vector<8x4xf32> to vector<8x1xf32>
    %8 = vector.extract_strided_slice %3 {offsets = [0, 2], sizes = [8, 1], strides = [1, 1]} : vector<8x4xf32> to vector<8x1xf32>
    %9 = vector.extract_strided_slice %3 {offsets = [0, 3], sizes = [8, 1], strides = [1, 1]} : vector<8x4xf32> to vector<8x1xf32>
    %10 = vector.extract_strided_slice %0 {offsets = [1, 0], sizes = [1, 128], strides = [1, 1]} : vector<5x128xf32> to vector<1x128xf32>
    %11 = vector.extract_strided_slice %0 {offsets = [2, 0], sizes = [1, 128], strides = [1, 1]} : vector<5x128xf32> to vector<1x128xf32>
    %12 = vector.extract_strided_slice %0 {offsets = [3, 0], sizes = [1, 128], strides = [1, 1]} : vector<5x128xf32> to vector<1x128xf32>
    %13 = vector.extract_strided_slice %0 {offsets = [4, 0], sizes = [1, 128], strides = [1, 1]} : vector<5x128xf32> to vector<1x128xf32>
    %14 = vector.broadcast %8 : vector<8x1xf32> to vector<8x128xf32>
    %15 = vector.broadcast %12 : vector<1x128xf32> to vector<8x128xf32>
    %16 = arith.minimumf %14, %15 : vector<8x128xf32>
    %17 = vector.broadcast %6 : vector<8x1xf32> to vector<8x128xf32>
    %18 = vector.broadcast %10 : vector<1x128xf32> to vector<8x128xf32>
    %19 = arith.maximumf %17, %18 : vector<8x128xf32>
    %20 = arith.subf %16, %19 : vector<8x128xf32>
    %cst = arith.constant 0.000000e+00 : f32
    %21 = vector.broadcast %cst : f32 to vector<8x128xf32>
    %22 = arith.maximumf %20, %21 : vector<8x128xf32>
    %23 = vector.broadcast %9 : vector<8x1xf32> to vector<8x128xf32>
    %24 = vector.broadcast %13 : vector<1x128xf32> to vector<8x128xf32>
    %25 = arith.minimumf %23, %24 : vector<8x128xf32>
    %26 = vector.broadcast %7 : vector<8x1xf32> to vector<8x128xf32>
    %27 = vector.broadcast %11 : vector<1x128xf32> to vector<8x128xf32>
    %28 = arith.maximumf %26, %27 : vector<8x128xf32>
    %29 = arith.subf %25, %28 : vector<8x128xf32>
    %cst_7 = arith.constant 0.000000e+00 : f32
    %30 = vector.broadcast %cst_7 : f32 to vector<8x128xf32>
    %31 = arith.maximumf %29, %30 : vector<8x128xf32>
    %32 = arith.mulf %22, %31 : vector<8x128xf32>
    %33 = arith.subf %8, %6 : vector<8x1xf32>
    %34 = arith.subf %9, %7 : vector<8x1xf32>
    %35 = arith.mulf %33, %34 : vector<8x1xf32>
    %36 = arith.subf %12, %10 : vector<1x128xf32>
    %37 = arith.subf %13, %11 : vector<1x128xf32>
    %38 = arith.mulf %36, %37 : vector<1x128xf32>
    %39 = vector.broadcast %35 : vector<8x1xf32> to vector<8x128xf32>
    %40 = vector.broadcast %38 : vector<1x128xf32> to vector<8x128xf32>
    %41 = arith.addf %39, %40 : vector<8x128xf32>
    %42 = arith.subf %41, %32 : vector<8x128xf32>
    %cst_8 = arith.constant 9.99999996E-13 : f32
    %43 = vector.broadcast %cst_8 : f32 to vector<8x128xf32>
    %44 = arith.maximumf %42, %43 : vector<8x128xf32>
    %45 = arith.divf %32, %44 : vector<8x128xf32>
    %cst_9 = arith.constant dense<0xFF800000> : vector<128xf32>
    %46 = vector.multi_reduction <maximumf>, %45, %cst_9 [0] : vector<8x128xf32> to vector<128xf32>
    %47 = vector.shape_cast %46 : vector<128xf32> to vector<1x128xf32>
    %48 = tpu.iota {dimensions = array<i32: 0>} : vector<8x128xi32>
    %49 = vector.broadcast %47 : vector<1x128xf32> to vector<8x128xf32>
    %50 = arith.cmpf oeq, %45, %49 : vector<8x128xf32>
    %c8_i32 = arith.constant 8 : i32
    %51 = vector.broadcast %c8_i32 : i32 to vector<8x128xi32>
    %52 = arith.select %50, %48, %51 : vector<8x128xi1>, vector<8x128xi32>
    %cst_10 = arith.constant dense<2147483647> : vector<128xi32>
    %53 = vector.multi_reduction <minsi>, %52, %cst_10 [0] : vector<8x128xi32> to vector<128xi32>
    %54 = vector.shape_cast %53 : vector<128xi32> to vector<1x128xi32>
    %55 = vector.broadcast %54 : vector<1x128xi32> to vector<8x128xi32>
    %56 = arith.cmpi eq, %48, %55 : vector<8x128xi32>
    %57 = arith.extui %56 : vector<8x128xi1> to vector<8x128xi32>
    %58 = arith.sitofp %57 : vector<8x128xi32> to vector<8x128xf32>
    %cst_11 = arith.constant 5.000000e-02 : f32
    %59 = vector.broadcast %cst_11 : f32 to vector<1x128xf32>
    %60 = arith.cmpf oge, %47, %59 : vector<1x128xf32>
    %cst_12 = arith.constant 3.000000e-01 : f32
    %61 = vector.broadcast %cst_12 : f32 to vector<1x128xf32>
    %62 = arith.cmpf oge, %1, %61 : vector<1x128xf32>
    %63 = arith.andi %60, %62 : vector<1x128xi1>
    %64 = arith.extui %63 : vector<1x128xi1> to vector<1x128xi32>
    %65 = arith.sitofp %64 : vector<1x128xi32> to vector<1x128xf32>
    %66 = vector.broadcast %5 : vector<8x1xf32> to vector<8x128xf32>
    %67 = arith.mulf %58, %66 : vector<8x128xf32>
    %cst_13 = arith.constant dense<0.000000e+00> : vector<128xf32>
    %68 = vector.multi_reduction <add>, %67, %cst_13 [0] : vector<8x128xf32> to vector<128xf32>
    %69 = vector.shape_cast %68 : vector<128xf32> to vector<1x128xf32>
    %c0_14 = arith.constant 0 : index
    %c0_15 = arith.constant 0 : index
    %70 = vector.load %arg4[%c0_14, %c0_15] : memref<10x128xf32, #tpu.memory_space<vmem>>, vector<1x128xf32>
    tpu.vector_store %arg4[%c0_14, %c0_15], %69 {strides = array<i32>} : memref<10x128xf32, #tpu.memory_space<vmem>>, vector<1x128xf32>,
    %c1 = arith.constant 1 : index
    %c0_16 = arith.constant 0 : index
    %71 = vector.load %arg4[%c1, %c0_16] : memref<10x128xf32, #tpu.memory_space<vmem>>, vector<1x128xf32>
    tpu.vector_store %arg4[%c1, %c0_16], %65 {strides = array<i32>} : memref<10x128xf32, #tpu.memory_space<vmem>>, vector<1x128xf32>,
    %72 = vector.extract_strided_slice %0 {offsets = [1, 0], sizes = [4, 128], strides = [1, 1]} : vector<5x128xf32> to vector<4x128xf32>
    %c2 = arith.constant 2 : index
    %c0_17 = arith.constant 0 : index
    %73 = vector.load %arg4[%c2, %c0_17] : memref<10x128xf32, #tpu.memory_space<vmem>>, vector<4x128xf32>
    tpu.vector_store %arg4[%c2, %c0_17], %72 {strides = array<i32>} : memref<10x128xf32, #tpu.memory_space<vmem>>, vector<4x128xf32>,
    %74 = vector.extract_strided_slice %3 {offsets = [0, 0], sizes = [8, 1], strides = [1, 1]} : vector<8x4xf32> to vector<8x1xf32>
    %75 = vector.broadcast %74 : vector<8x1xf32> to vector<8x128xf32>
    %76 = arith.mulf %58, %75 : vector<8x128xf32>
    %cst_18 = arith.constant dense<0.000000e+00> : vector<128xf32>
    %77 = vector.multi_reduction <add>, %76, %cst_18 [0] : vector<8x128xf32> to vector<128xf32>
    %78 = vector.shape_cast %77 : vector<128xf32> to vector<1x128xf32>
    %c6 = arith.constant 6 : index
    %c0_19 = arith.constant 0 : index
    %79 = vector.load %arg4[%c6, %c0_19] : memref<10x128xf32, #tpu.memory_space<vmem>>, vector<1x128xf32>
    tpu.vector_store %arg4[%c6, %c0_19], %78 {strides = array<i32>} : memref<10x128xf32, #tpu.memory_space<vmem>>, vector<1x128xf32>,
    %80 = vector.extract_strided_slice %3 {offsets = [0, 1], sizes = [8, 1], strides = [1, 1]} : vector<8x4xf32> to vector<8x1xf32>
    %81 = vector.broadcast %80 : vector<8x1xf32> to vector<8x128xf32>
    %82 = arith.mulf %58, %81 : vector<8x128xf32>
    %cst_20 = arith.constant dense<0.000000e+00> : vector<128xf32>
    %83 = vector.multi_reduction <add>, %82, %cst_20 [0] : vector<8x128xf32> to vector<128xf32>
    %84 = vector.shape_cast %83 : vector<128xf32> to vector<1x128xf32>
    %c7 = arith.constant 7 : index
    %c0_21 = arith.constant 0 : index
    %85 = vector.load %arg4[%c7, %c0_21] : memref<10x128xf32, #tpu.memory_space<vmem>>, vector<1x128xf32>
    tpu.vector_store %arg4[%c7, %c0_21], %84 {strides = array<i32>} : memref<10x128xf32, #tpu.memory_space<vmem>>, vector<1x128xf32>,
    %86 = vector.extract_strided_slice %3 {offsets = [0, 2], sizes = [8, 1], strides = [1, 1]} : vector<8x4xf32> to vector<8x1xf32>
    %87 = vector.broadcast %86 : vector<8x1xf32> to vector<8x128xf32>
    %88 = arith.mulf %58, %87 : vector<8x128xf32>
    %cst_22 = arith.constant dense<0.000000e+00> : vector<128xf32>
    %89 = vector.multi_reduction <add>, %88, %cst_22 [0] : vector<8x128xf32> to vector<128xf32>
    %90 = vector.shape_cast %89 : vector<128xf32> to vector<1x128xf32>
    %c8 = arith.constant 8 : index
    %c0_23 = arith.constant 0 : index
    %91 = vector.load %arg4[%c8, %c0_23] : memref<10x128xf32, #tpu.memory_space<vmem>>, vector<1x128xf32>
    tpu.vector_store %arg4[%c8, %c0_23], %90 {strides = array<i32>} : memref<10x128xf32, #tpu.memory_space<vmem>>, vector<1x128xf32>,
    %92 = vector.extract_strided_slice %3 {offsets = [0, 3], sizes = [8, 1], strides = [1, 1]} : vector<8x4xf32> to vector<8x1xf32>
    %93 = vector.broadcast %92 : vector<8x1xf32> to vector<8x128xf32>
    %94 = arith.mulf %58, %93 : vector<8x128xf32>
    %cst_24 = arith.constant dense<0.000000e+00> : vector<128xf32>
    %95 = vector.multi_reduction <add>, %94, %cst_24 [0] : vector<8x128xf32> to vector<128xf32>
    %96 = vector.shape_cast %95 : vector<128xf32> to vector<1x128xf32>
    %c9 = arith.constant 9 : index
    %c0_25 = arith.constant 0 : index
    %97 = vector.load %arg4[%c9, %c0_25] : memref<10x128xf32, #tpu.memory_space<vmem>>, vector<1x128xf32>
    tpu.vector_store %arg4[%c9, %c0_25], %96 {strides = array<i32>} : memref<10x128xf32, #tpu.memory_space<vmem>>, vector<1x128xf32>,
    return
  }
  func.func @transform_0(%arg0: i32) -> (i32, i32) {
    %c0_i32 = arith.constant 0 : i32
    %c0_i32_0 = arith.constant 0 : i32
    return %c0_i32, %arg0 : i32, i32
  }
  func.func @transform_1(%arg0: i32) -> (i32, i32, i32) {
    %c0_i32 = arith.constant 0 : i32
    %c0_i32_0 = arith.constant 0 : i32
    %c0_i32_1 = arith.constant 0 : i32
    return %arg0, %c0_i32, %c0_i32_0 : i32, i32, i32
  }
  func.func @transform_2(%arg0: i32) -> (i32, i32, i32) {
    %c0_i32 = arith.constant 0 : i32
    %c0_i32_0 = arith.constant 0 : i32
    %c0_i32_1 = arith.constant 0 : i32
    return %arg0, %c0_i32, %c0_i32_0 : i32, i32, i32
  }
  func.func @transform_3(%arg0: i32) -> (i32, i32) {
    %c0_i32 = arith.constant 0 : i32
    %c0_i32_0 = arith.constant 0 : i32
    return %c0_i32, %arg0 : i32, i32
  }
}

</mosaic_0001>

<llo_original>
// kernel: tpu_custom_call.1
$region0: #{tpu_custom_call.1}
  #allocation0 [shape = 'u32[]', space=smem, size = 0x4, offset = 0x4, fixed_abs, tag = 'smem constant byte address 0x4 - core index']
  #allocation1 [shape = 'u32[144,128]{1,0:T(1,128)}', space=vmem, size = 0x12000, scoped, tag = 'internal scratch']
  %s0 = inlined_call_operand.vmem [shape: f32[5,256], index: 0, kind: input, shape index: {}]
  %s1 = inlined_call_operand.vmem [shape: f32[2,8,4], index: 1, kind: input, shape index: {}]
  %s2 = inlined_call_operand.vmem [shape: f32[2,8,1], index: 2, kind: input, shape index: {}]
  %s3 = inlined_call_operand.hbm [shape: f32[10,256], index: 3, kind: output, shape index: {}]
  %s4 = sld [smem:[#allocation0]]
  $region45: #{tpu_custom_call.1} parent=0
    _
  %s6 = ssub.s32 1, %s4
  %s7 = scalar_select 0, %s6, %s4
  $region1: #{tpu_custom_call.1} parent=0
    #allocation2 [shape = 'u8[16384]{0}', space=vmem, size = 0x4000, scoped, tag = 'output window, operand 0']
    #allocation3 [shape = 's32[2]{0}', space=sflag, size = 0x8, scoped, tag = 'scoped memory for tpu_custom_call.1']
    %8 = vsyncpa [#allocation3], 0
    %s9 = scalar_lea.sflag [#allocation3], 1
    %10 = vsyncpa %s9, 0
    loop: start=0, step=1, limit=4
    $region2: #{tpu_custom_call.1} parent=1 // loop_pre_header
      _
    $region3: #{tpu_custom_call.1} parent=1 // loop_header
      %s12 = sphi 0, %s16
      %p13 = scmp.ge.s32.totalorder %s12, 4
      %s22 = sphi 0, %s24
      %s25 = sphi 0, %s22
      %s26 = sphi 0, %s25
      %s42 = sphi 0, %s26
      %s48 = sphi 0, %s50
      %s51 = sphi 0, %s48
      %s52 = sphi 0, %s51
      %s68 = sphi 0, %s52
      %s74 = sphi 0, %s76
      %s77 = sphi 0, %s74
      %s78 = sphi 0, %s77
      %s94 = sphi 0, %s78
      %s100 = sphi 0, %s102
      %s103 = sphi 0, %s100
      %s104 = sphi 0, %s103
      %s120 = sphi 0, %s104
    $region4: #{tpu_custom_call.1} parent=1 // loop_header_branch
      %15 = sbr.rel (%p13) target = $region8
    $region5: #{tpu_custom_call.1} parent=1 // loop_body
      %s17 = ssub.s32 %s12, 1
      %s18 = ssub.s32 %s12, 2
      %s19 = sadd.s32 %s12, 1
      %s20 = ssub.s32 %s12, %s19
      %p21 = scmp.eq.s32.totalorder %s20, 0
      %s23 = sadd.s32 %s22, 1
      %s24 = scalar_select %p21, %s22, %s23
      %p27 = pneg %p21
      %p28 = scmp.eq.s32.totalorder %s12, 1
      %p29 = por %p27, %p28
      %p30 = scmp.ne.s32.totalorder %s22, %s25
      %p31 = scmp.eq.s32.totalorder %s12, 0
      %p32 = por %p30, %p31
      %p33 = scmp.ne.s32.totalorder %s22, %s25
      %p34 = scmp.eq.s32.totalorder %s17, 1
      %p35 = por %p33, %p34
      %p36 = scmp.ne.s32.totalorder %s25, %s26
      %p37 = scmp.eq.s32.totalorder %s17, 0
      %p38 = por %p36, %p37
      %p39 = scmp.ne.s32.totalorder %s25, %s26
      %p40 = scmp.eq.s32.totalorder %s18, 1
      %p41 = por %p39, %p40
      %p43 = scmp.ne.s32.totalorder %s26, %s42
      %p44 = scmp.eq.s32.totalorder %s18, 0
      %p45 = por %p43, %p44
      %s46 = ssub.s32 %s12, %s19
      %p47 = scmp.eq.s32.totalorder %s46, 0
      %s49 = sadd.s32 %s48, 1
      %s50 = scalar_select %p47, %s48, %s49
      %p53 = pneg %p47
      %p54 = scmp.eq.s32.totalorder %s12, 1
      %p55 = por %p53, %p54
      %p56 = scmp.ne.s32.totalorder %s48, %s51
      %p57 = scmp.eq.s32.totalorder %s12, 0
      %p58 = por %p56, %p57
      %p59 = scmp.ne.s32.totalorder %s48, %s51
      %p60 = scmp.eq.s32.totalorder %s17, 1
      %p61 = por %p59, %p60
      %p62 = scmp.ne.s32.totalorder %s51, %s52
      %p63 = scmp.eq.s32.totalorder %s17, 0
      %p64 = por %p62, %p63
      %p65 = scmp.ne.s32.totalorder %s51, %s52
      %p66 = scmp.eq.s32.totalorder %s18, 1
      %p67 = por %p65, %p66
      %p69 = scmp.ne.s32.totalorder %s52, %s68
      %p70 = scmp.eq.s32.totalorder %s18, 0
      %p71 = por %p69, %p70
      %s72 = ssub.s32 %s12, %s19
      %p73 = scmp.eq.s32.totalorder %s72, 0
      %s75 = sadd.s32 %s74, 1
      %s76 = scalar_select %p73, %s74, %s75
      %p79 = pneg %p73
      %p80 = scmp.eq.s32.totalorder %s12, 1
      %p81 = por %p79, %p80
      %p82 = scmp.ne.s32.totalorder %s74, %s77
      %p83 = scmp.eq.s32.totalorder %s12, 0
      %p84 = por %p82, %p83
      %p85 = scmp.ne.s32.totalorder %s74, %s77
      %p86 = scmp.eq.s32.totalorder %s17, 1
      %p87 = por %p85, %p86
      %p88 = scmp.ne.s32.totalorder %s77, %s78
      %p89 = scmp.eq.s32.totalorder %s17, 0
      %p90 = por %p88, %p89
      %p91 = scmp.ne.s32.totalorder %s77, %s78
      %p92 = scmp.eq.s32.totalorder %s18, 1
      %p93 = por %p91, %p92
      %p95 = scmp.ne.s32.totalorder %s78, %s94
      %p96 = scmp.eq.s32.totalorder %s18, 0
      %p97 = por %p95, %p96
      %s98 = ssub.s32 %s12, %s19
      %p99 = scmp.eq.s32.totalorder %s98, 0
      %s101 = sadd.s32 %s100, 1
      %s102 = scalar_select %p99, %s100, %s101
      %p105 = pneg %p99
      %p106 = scmp.eq.s32.totalorder %s12, 1
      %p107 = por %p105, %p106
      %p108 = scmp.ne.s32.totalorder %s100, %s103
      %p109 = scmp.eq.s32.totalorder %s12, 0
      %p110 = por %p108, %p109
      %p111 = scmp.ne.s32.totalorder %s100, %s103
      %p112 = scmp.eq.s32.totalorder %s17, 1
      %p113 = por %p111, %p112
      %p114 = scmp.ne.s32.totalorder %s103, %s104
      %p115 = scmp.eq.s32.totalorder %s17, 0
      %p116 = por %p114, %p115
      %p117 = scmp.ne.s32.totalorder %s103, %s104
      %p118 = scmp.eq.s32.totalorder %s18, 1
      %p119 = por %p117, %p118
      %p121 = scmp.ne.s32.totalorder %s104, %s120
      %p122 = scmp.eq.s32.totalorder %s18, 0
      %p123 = por %p121, %p122
      %p124 = scmp.le.s32.totalorder 1, %s12
      %p125 = scmp.lt.s32.totalorder %s12, 3
      %p126 = pnand %p124, %p125
      %p127 = pneg %p126
      // Predicated region
      $region9: #{tpu_custom_call.1} parent=5 // pred_check
        _
      $region10: #{tpu_custom_call.1} parent=5 // pred_check_branch
        %129 = sbr.rel (%p126) target = $region12
      $region11: #{tpu_custom_call.1} parent=5 // pred_region
        %s130 = ssub.s32 %s12, 1
      $region12: #{tpu_custom_call.1} parent=5 // pred_fallthru
        _
      %p131 = scmp.lt.s32.totalorder %s12, 2
      // Predicated region
      $region13: #{tpu_custom_call.1} parent=5 // pred_check
        %p132 = pneg %p131
      $region14: #{tpu_custom_call.1} parent=5 // pred_check_branch
        %134 = sbr.rel (%p132) target = $region16
      $region15: #{tpu_custom_call.1} parent=5 // pred_region
        // Predicated region
        $region17: #{tpu_custom_call.1} parent=15 // pred_check
          %p135 = pneg %p32
        $region18: #{tpu_custom_call.1} parent=15 // pred_check_branch
          %137 = sbr.rel (%p135) target = $region20
        $region19: #{tpu_custom_call.1} parent=15 // pred_region
          %p138 = scmp.lt.s32.totalorder %s12, 1
          %s139 = scalar_select %p138, %s12, 1
          %s140 = smul.addr %s139, 8
          %s141 = scalar_lea.vmem %s0, %s140
        $region20: #{tpu_custom_call.1} parent=15 // pred_fallthru
          _
        // Predicated region
        $region21: #{tpu_custom_call.1} parent=15 // pred_check
          %p142 = pneg %p58
        $region22: #{tpu_custom_call.1} parent=15 // pred_check_branch
          %144 = sbr.rel (%p142) target = $region24
        $region23: #{tpu_custom_call.1} parent=15 // pred_region
          %p145 = scmp.lt.s32.totalorder %s12, 1
          %s146 = scalar_select %p145, %s12, 1
          %s147 = smul.addr %s146, 8
          %s148 = scalar_lea.vmem %s1, %s147
        $region24: #{tpu_custom_call.1} parent=15 // pred_fallthru
          _
        // Predicated region
        $region25: #{tpu_custom_call.1} parent=15 // pred_check
          %p149 = pneg %p84
        $region26: #{tpu_custom_call.1} parent=15 // pred_check_branch
          %151 = sbr.rel (%p149) target = $region28
        $region27: #{tpu_custom_call.1} parent=15 // pred_region
          %p152 = scmp.lt.s32.totalorder %s12, 1
          %s153 = scalar_select %p152, %s12, 1
          %s154 = smul.addr %s153, 8
          %s155 = scalar_lea.vmem %s2, %s154
        $region28: #{tpu_custom_call.1} parent=15 // pred_fallthru
          _
      $region16: #{tpu_custom_call.1} parent=5 // pred_fallthru
        _
      %p156 = scmp.le.s32.totalorder 1, %s12
      %p157 = scmp.lt.s32.totalorder %s12, 3
      %p158 = pnand %p156, %p157
      %p159 = pneg %p158
      // Predicated region
      $region29: #{tpu_custom_call.1} parent=5 // pred_check
        _
      $region30: #{tpu_custom_call.1} parent=5 // pred_check_branch
        %161 = sbr.rel (%p158) target = $region32
      $region31: #{tpu_custom_call.1} parent=5 // pred_region
        %s162 = ssub.s32 %s12, 1
        %p163 = scmp.lt.s32.totalorder %s17, 1
        %s164 = scalar_select %p163, %s17, 1
        %s165 = smul.addr %s164, 8
        %s166 = scalar_lea.vmem %s0, %s165
        %p167 = pneg %p38
        %p168 = pneg %p35
        %p169 = scmp.lt.s32.totalorder %s17, 1
        %s170 = scalar_select %p169, %s17, 1
        %s171 = smul.addr %s170, 8
        %s172 = scalar_lea.vmem %s1, %s171
        %p173 = pneg %p64
        %p174 = pneg %p61
        %p175 = scmp.lt.s32.totalorder %s17, 1
        %s176 = scalar_select %p175, %s17, 1
        %s177 = smul.addr %s176, 8
        %s178 = scalar_lea.vmem %s2, %s177
        %p179 = pneg %p90
        %p180 = pneg %p87
        %p181 = pneg %p116
        %p182 = pneg %p113
        %s183 = sand.u32 %s103, 1
        %s184 = scalar_lea.sflag [#allocation3], %s183
        %s185 = sand.u32 %s103, 1
        %s186 = smul.addr %s185, 16
        %s187 = scalar_lea.vmem [#allocation2], %s186
        %p188 = scmp.lt.s32.totalorder %s17, 1
        %s189 = scalar_select %p188, %s17, 1
        %s190 = smul.addr %s189, 8
        %s191 = scalar_lea.vmem %s0, %s190
        %p192 = scmp.lt.s32.totalorder %s17, 1
        %s193 = scalar_select %p192, %s17, 1
        %s194 = smul.addr %s193, 8
        %s195 = scalar_lea.vmem %s1, %s194
        %p196 = scmp.lt.s32.totalorder %s17, 1
        %s197 = scalar_select %p196, %s17, 1
        %s198 = smul.addr %s197, 8
        %s199 = scalar_lea.vmem %s2, %s198
        %v200 = vld [vmem:[%s191] sm:$0x1f]
        %v201 = vld [vmem:[%s195] sm:$0xff]
        %v202 = vld [vmem:[%s199] sm:$0xff]
        %204 = vset.pattern.permute.xlu0 2
        %205 = vperm.xlu0 %204, %v201
        %v206 = vpop.permute.xlu0 %205
        %v208 = vlaneseq
        %v209 = vshrl.u32 %v208, 7
        %v210 = vsub.s32 3, %v209
        %v211 = vrot.slane %v200, %v210
        %v212 = vmin.f32 %v206, %v211
        %213 = vset.pattern.permute.xlu0 0
        %214 = vperm.xlu0 %213, %v201
        %v215 = vpop.permute.xlu0 %214
        %v217 = vlaneseq
        %v218 = vshrl.u32 %v217, 7
        %v219 = vsub.s32 1, %v218
        %v220 = vrot.slane %v200, %v219
        %v221 = vmax.f32 %v215, %v220
        %v222 = vsub.f32 %v212, %v221
        %v223 = vmax.f32 %v222, 0.0
        %224 = vset.pattern.permute.xlu0 3
        %225 = vperm.xlu0 %224, %v201
        %v226 = vpop.permute.xlu0 %225
        %v228 = vlaneseq
        %v229 = vshrl.u32 %v228, 7
        %v230 = vsub.s32 4, %v229
        %v231 = vrot.slane %v200, %v230
        %v232 = vmin.f32 %v226, %v231
        %233 = vset.pattern.permute.xlu0 1
        %234 = vperm.xlu0 %233, %v201
        %v235 = vpop.permute.xlu0 %234
        %v237 = vlaneseq
        %v238 = vshrl.u32 %v237, 7
        %v239 = vsub.s32 2, %v238
        %v240 = vrot.slane %v200, %v239
        %v241 = vmax.f32 %v235, %v240
        %v242 = vsub.f32 %v232, %v241
        %v243 = vmax.f32 %v242, 0.0
        %v244 = vmul.f32 %v223, %v243
        %245 = vrot.lane.b32.xlu0 %v201, 2
        %v246 = vpop.permute.xlu0 %245
        %v248 = vsub.f32 %v201, %v246
        %250 = vrot.lane.b32.xlu0 %v248, 127
        %v251 = vpop.permute.xlu0 %250
        %v253 = vmul.f32 %v248, %v251
        %v255 = vrot.slane %v200, 6
        %v257 = vsub.f32 %v200, %v255
        %v259 = vrot.slane %v257, 1
        %v261 = vmul.f32 %v257, %v259
        %263 = vset.pattern.permute.xlu0 2
        %264 = vperm.xlu0 %263, %v253
        %v265 = vpop.permute.xlu0 %264
        %v267 = vlaneseq
        %v268 = vshrl.u32 %v267, 7
        %v269 = vsub.s32 3, %v268
        %v270 = vrot.slane %v261, %v269
        %v271 = vadd.f32 %v265, %v270
        %v272 = vsub.f32 %v271, %v244
        %v273 = vmax.f32 %v272, 1e-12
        %v274 = vrcp.pop %v273
        %v275 = vmul.f32 %v244, %v274
        %v276 = vrot.slane %v275, 4
        %v277 = vmax.f32 %v275, %v276
        %v278 = vrot.slane %v277, 2
        %v279 = vmax.f32 %v277, %v278
        %v280 = vrot.slane %v279, 1
        %v281 = vmax.f32 %v279, %v280
        %v282 = vlaneseq
        %v283 = vshrl.u32 %v282, 7
        %vm284 = vcmp.eq.f32.partialorder %v275, %v281
        %v285 = vsel %vm284, %v283, 8
        %v286 = vrot.slane %v285, 4
        %vm287 = vcmp.lt.s32.totalorder %v285, %v286
        %v288 = vsel %vm287, %v285, %v286
        %v289 = vrot.slane %v288, 2
        %vm290 = vcmp.lt.s32.totalorder %v288, %v289
        %v291 = vsel %vm290, %v288, %v289
        %v292 = vrot.slane %v291, 1
        %vm293 = vcmp.lt.s32.totalorder %v291, %v292
        %v294 = vsel %vm293, %v291, %v292
        %vm295 = vcmp.eq.s32.totalorder %v283, %v294
        %v296 = vsel %vm295, 1, 0
        %v297 = vcvt.s32.f32 %v296
        %vm298 = vcmp.ge.f32.partialorder %v281, 0.05
        %vm299 = vcmp.ge.f32.partialorder %v200, 0.3
        %vm300 = vmand %vm298, %vm299
        %v301 = vsel %vm300, 1, 0
        %v302 = vcvt.s32.f32 %v301
        %304 = vset.pattern.permute.xlu0 0
        %305 = vperm.xlu0 %304, %v202
        %v306 = vpop.permute.xlu0 %305
        %v308 = vmul.f32 %v297, %v306
        %v309 = vrot.slane %v308, 4
        %v310 = vadd.f32 %v308, %v309
        %v311 = vrot.slane %v310, 2
        %v312 = vadd.f32 %v310, %v311
        %v313 = vrot.slane %v312, 1
        %v314 = vadd.f32 %v312, %v313
        %315 = vst [vmem:[%s187] sm:$0x1] %v314
        %316 = vst [vmem:[%s187 + $0x1] sm:$0x1] %v302
        %317 = vst [vmem:[%s187 + $0x1] sm:$0x1e] %v200
        %v318 = vmul.f32 %v297, %v215
        %v319 = vrot.slane %v318, 4
        %v320 = vadd.f32 %v318, %v319
        %v321 = vrot.slane %v320, 2
        %v322 = vadd.f32 %v320, %v321
        %v323 = vrot.slane %v322, 1
        %v324 = vadd.f32 %v322, %v323
        %325 = vst [vmem:[%s187 + $0x6] sm:$0x1] %v324
        %v326 = vmul.f32 %v297, %v235
        %v327 = vrot.slane %v326, 4
        %v328 = vadd.f32 %v326, %v327
        %v329 = vrot.slane %v328, 2
        %v330 = vadd.f32 %v328, %v329
        %v331 = vrot.slane %v330, 1
        %v332 = vadd.f32 %v330, %v331
        %333 = vst [vmem:[%s187 + $0x7] sm:$0x1] %v332
        %v334 = vmul.f32 %v297, %v206
        %v335 = vrot.slane %v334, 4
        %v336 = vadd.f32 %v334, %v335
        %v337 = vrot.slane %v336, 2
        %v338 = vadd.f32 %v336, %v337
        %v339 = vrot.slane %v338, 1
        %v340 = vadd.f32 %v338, %v339
        %341 = vst [vmem:[%s187 + $0x8] sm:$0x1] %v340
        %v342 = vmul.f32 %v297, %v226
        %v343 = vrot.slane %v342, 4
        %v344 = vadd.f32 %v342, %v343
        %v345 = vrot.slane %v344, 2
        %v346 = vadd.f32 %v344, %v345
        %v347 = vrot.slane %v346, 1
        %v348 = vadd.f32 %v346, %v347
        %349 = vst [vmem:[%s187 + $0x9] sm:$0x1] %v348
        %s350 = sand.u32 %s103, 1
        %s351 = scalar_lea.sflag [#allocation3], %s350
        %s352 = sand.u32 %s103, 1
        %s353 = smul.addr %s352, 16
        %s354 = scalar_lea.vmem [#allocation2], %s353
        // Predicated region
        $region33: #{tpu_custom_call.1} parent=31 // pred_check
          %p355 = pneg %p113
        $region34: #{tpu_custom_call.1} parent=31 // pred_check_branch
          %357 = sbr.rel (%p355) target = $region36
        $region35: #{tpu_custom_call.1} parent=31 // pred_region
          %s359 = ssub.s32 256, 256
          %360 = vsyncadd %s351, %s359
          %s361 = smul.addr %s17, 128
          %s362 = scalar_lea.hbm %s3, %s361
          %s363 = sshll.u32 %s354, 4
          %s364 = int_to_ptr.vmem [resolvable:$true] %s363
          %369 = dma.vmem_to_hbm [thread:$0]  %s364, 256, %s362, %s351, 128, 256, 8
        $region36: #{tpu_custom_call.1} parent=31 // pred_fallthru
          _
      $region32: #{tpu_custom_call.1} parent=5 // pred_fallthru
        _
      %p370 = scmp.le.s32.totalorder 2, %s12
      // Predicated region
      $region37: #{tpu_custom_call.1} parent=5 // pred_check
        %p371 = pneg %p370
      $region38: #{tpu_custom_call.1} parent=5 // pred_check_branch
        %373 = sbr.rel (%p371) target = $region40
      $region39: #{tpu_custom_call.1} parent=5 // pred_region
        %s374 = ssub.s32 %s12, 2
        // Predicated region
        $region41: #{tpu_custom_call.1} parent=39 // pred_check
          %p375 = pneg %p119
        $region42: #{tpu_custom_call.1} parent=39 // pred_check_branch
          %377 = sbr.rel (%p375) target = $region44
        $region43: #{tpu_custom_call.1} parent=39 // pred_region
          %s378 = sand.u32 %s104, 1
          %s379 = scalar_lea.sflag [#allocation3], %s378
          %s380 = sand.u32 %s104, 1
          %s381 = smul.addr %s380, 16
          %s382 = scalar_lea.vmem [#allocation2], %s381
          %383 = dma.done %s379, 256
        $region44: #{tpu_custom_call.1} parent=39 // pred_fallthru
          _
      $region40: #{tpu_custom_call.1} parent=5 // pred_fallthru
        _
    $region6: #{tpu_custom_call.1} parent=1 // loop_footer
      %s16 = sadd.s32 1, %s12
    $region7: #{tpu_custom_call.1} parent=1 // loop_footer_branch
      %11 = sbr.rel target = $region3
    $region8: #{tpu_custom_call.1} parent=1 // loop_exit
      _
    %384 = vsyncpa [#allocation3], 1
    %s385 = scalar_lea.sflag [#allocation3], 1
    %386 = vsyncpa %s385, 1

</llo_original>
